<compile_context>
chip_gen: v7x
topology: tpu7x:2x2x1
jax: 0.10.0
libtpu: 0.0.40
codegen_flags: <defaults>
</compile_context>

<pallas_src>
import functools

import jax
import jax.numpy as jnp
from jax import lax
from jax.experimental import pallas as pl
from jax.experimental.pallas import tpu as pltpu


# --------------------------------- helpers ----------------------------------

def _round_up(x, m):
    return (x + m - 1) // m * m


def _pick_tile(dim, target, quantum):
    """Largest tile <= target that divides dim (dim is a multiple of quantum)."""
    if dim <= target:
        return dim
    t = (target // quantum) * quantum
    while dim % t:
        t -= quantum
    return t


def _pad2(x, shape):
    return jnp.pad(x, [(0, s - d) for d, s in zip(x.shape, shape)])


def _pad_gate_cols(w, nhid, nhid_pad):
    """(*, 4*nhid) with i,f,g,o blocks -> (*, 4*nhid_pad), each block zero-padded."""
    lead = w.shape[:-1]
    w4 = w.reshape(lead + (4, nhid))
    w4 = jnp.pad(w4, [(0, 0)] * (len(lead) + 1) + [(0, nhid_pad - nhid)])
    return w4.reshape(lead + (4 * nhid_pad,))


def _tpu_config():
    """Generation-aware VMEM limits / projection tile targets / TC split."""
    try:
        kind = jax.devices()[0].device_kind.lower()
    except Exception:  # pragma: no cover - CPU fallback
        kind = ""
    big_vmem = any(g in kind for g in ("v4", "v5", "v6"))   # 128 MiB VMEM class
    is_v7 = "v7" in kind
    if big_vmem:
        return dict(proj_vmem=96 << 20, lstm_vmem=96 << 20,
                    tm=512, tn=1024, tk=512, two_tc=False)
    # v7x (64 MiB per TC, 2 TCs) or unknown generation: stay conservative.
    return dict(proj_vmem=48 << 20, lstm_vmem=48 << 20,
                tm=256, tn=512, tk=512, two_tc=is_v7)


def _budget_t_chunk(seq, b_blk, h_pad, dt_bytes, vmem_budget_bytes):
    """Largest time chunk whose pipelined VMEM footprint fits the budget.

    Budget = 2 * t * B * 4H * dt   (x_proj in, double buffered)
           + 2 * t * B *  H * dt   (h_seq out, double buffered)
           +      H * 4H * dt      (W_hh, single-buffered VMEM scratch)
           + small f32 scratch / resident final-state blocks.
    The chunk is then balanced against seq so the masked tail stays small.
    """
    fixed = (h_pad * 4 * h_pad * dt_bytes        # W_hh scratch (single copy)
             + 2 * b_blk * h_pad * 4             # h/c f32 scratch
             + 4 * b_blk * h_pad * 4)            # hN/cN resident output blocks
    per_t = 2 * b_blk * 4 * h_pad * dt_bytes + 2 * b_blk * h_pad * dt_bytes
    t_max = max(1, int((vmem_budget_bytes - fixed) // per_t))
    t_max = min(t_max, 128, max(seq, 1))
    n_chunks = -(-seq // t_max)                  # ceil
    return -(-seq // n_chunks)                   # minimize masked tail


# -------------------- seq-parallel projection (K-tiled) ----------------------

def _proj_kernel(x_ref, w_ref, b_ref, o_ref, acc_ref):
    """o = x @ w + b for one (tm, tn) output tile, accumulated over the K axis."""
    @pl.when(pl.program_id(2) == 0)
    def _():
        acc_ref[...] = jnp.zeros_like(acc_ref)

    acc_ref[...] += jnp.dot(x_ref[...], w_ref[...],
                            preferred_element_type=jnp.float32)

    @pl.when(pl.program_id(2) == pl.num_programs(2) - 1)
    def _():
        o_ref[...] = (acc_ref[...] + b_ref[...]).astype(o_ref.dtype)


def _matmul_bias(x, w, b, out_dtype, *, tm_target, tn_target, tk_target,
                 vmem_limit):
    """x: (M, K), w: (K, N), b: (1, N) -> (M, N).  M % 8 == 0, N,K % 128 == 0."""
    M, K = x.shape
    N = w.shape[1]
    tm = _pick_tile(M, tm_target, 8)
    tn = _pick_tile(N, tn_target, 128)
    tk = _pick_tile(K, tk_target, 128)
    return pl.pallas_call(
        _proj_kernel,
        out_shape=jax.ShapeDtypeStruct((M, N), out_dtype),
        grid_spec=pltpu.PrefetchScalarGridSpec(
            num_scalar_prefetch=0,
            grid=(M // tm, N // tn, K // tk),
            in_specs=[
                pl.BlockSpec((tm, tk), lambda i, j, k: (i, k)),
                pl.BlockSpec((tk, tn), lambda i, j, k: (k, j)),
                pl.BlockSpec((1, tn), lambda i, j, k: (0, j)),
            ],
            out_specs=pl.BlockSpec((tm, tn), lambda i, j, k: (i, j)),
            scratch_shapes=[pltpu.VMEM((tm, tn), jnp.float32)],
        ),
        compiler_params=pltpu.CompilerParams(
            dimension_semantics=("parallel", "parallel", "arbitrary"),
            vmem_limit_bytes=int(vmem_limit)),
    )(x, w, b)


# ----------------------------- LSTM recurrence -------------------------------

def _lstm_recurrent_kernel(xp_ref, whh_hbm, hseq_ref, hN_ref, cN_ref,
                           h_scr, c_scr, whh_vmem, dma_sem,
                           *, nhid_pad, t_chunk, seq_len, needs_mask,
                           compute_dtype):
    """One grid step == `t_chunk` LSTM timesteps for one batch block.

    xp_ref:    (t_chunk, Bb, 4*H)  precomputed x @ W_ih^T + (b_ih + b_hh)
    whh_hbm:   (H, 4*H)            W_hh^T, left in HBM (memory_space=ANY)
    hseq_ref:  (t_chunk, Bb, H)    per-timestep hidden states (decoder input)
    hN_ref, cN_ref: (1, Bb, H)     final hidden / cell state (f32, resident)
    h_scr, c_scr:   (Bb, H) f32    VMEM-resident recurrent state
    whh_vmem:  (H, 4*H)            single-buffered VMEM copy of W_hh
    """
    H = nhid_pad

    @pl.when(pl.program_id(1) == 0)
    def _():
        # Once per core / per batch block: copy the loop-invariant W_hh into
        # single-buffered VMEM (no double-buffered BlockSpec copy) and zero the
        # recurrent state.
        cp = pltpu.make_async_copy(whh_hbm, whh_vmem, dma_sem.at[0])
        cp.start()
        h_scr[...] = jnp.zeros_like(h_scr)
        c_scr[...] = jnp.zeros_like(c_scr)
        cp.wait()

    whh = whh_vmem[...]
    t0 = pl.program_id(1) * t_chunk

    def sigmoid(x):
        # One EUP op (tanh) + VPU FMA instead of the exp/add/divide lowering.
        return 0.5 * jnp.tanh(0.5 * x) + 0.5

    def step(t, carry):
        h, c = carry                                     # f32 (Bb, H)
        gates = (xp_ref[t].astype(jnp.float32)
                 + jnp.dot(h.astype(compute_dtype), whh,
                           preferred_element_type=jnp.float32))
        i_g = sigmoid(gates[:, 0 * H:1 * H])
        f_g = sigmoid(gates[:, 1 * H:2 * H])
        g_g = jnp.tanh(gates[:, 2 * H:3 * H])
        o_g = sigmoid(gates[:, 3 * H:4 * H])
        c_new = f_g * c + i_g * g_g
        h_new = o_g * jnp.tanh(c_new)
        if needs_mask:
            # Padded timesteps (seq padded up to a multiple of t_chunk) must
            # NOT advance the state: zero xp is not an LSTM no-op.
            keep = ((t0 + t) < seq_len).astype(jnp.float32)
            h_new = keep * h_new + (1.0 - keep) * h
            c_new = keep * c_new + (1.0 - keep) * c
        hseq_ref[t] = h_new.astype(hseq_ref.dtype)
        return h_new, c_new

    h_fin, c_fin = lax.fori_loop(0, t_chunk, step,
                                 (h_scr[...], c_scr[...]),
                                 unroll=min(8, t_chunk))

    h_scr[...] = h_fin
    c_scr[...] = c_fin
    # Resident (constant time-index) final-state outputs, written every chunk.
    hN_ref[0] = h_fin
    cN_ref[0] = c_fin


def _lstm_scan(x_proj, w_hh_p, *, t_chunk, n_bsplit, seq_len, vmem_limit):
    seq_pad, b_pad, gdim = x_proj.shape
    h_pad = gdim // 4
    b_blk = b_pad // n_bsplit
    cdt = x_proj.dtype
    kernel = functools.partial(
        _lstm_recurrent_kernel, nhid_pad=h_pad, t_chunk=t_chunk,
        seq_len=seq_len, needs_mask=(seq_pad != seq_len), compute_dtype=cdt)
    return pl.pallas_call(
        kernel,
        out_shape=(
            jax.ShapeDtypeStruct((seq_pad, b_pad, h_pad), cdt),
            jax.ShapeDtypeStruct((1, b_pad, h_pad), jnp.float32),
            jax.ShapeDtypeStruct((1, b_pad, h_pad), jnp.float32),
        ),
        grid_spec=pltpu.PrefetchScalarGridSpec(
            num_scalar_prefetch=0,
            grid=(n_bsplit, seq_pad // t_chunk),
            in_specs=[
                pl.BlockSpec((t_chunk, b_blk, 4 * h_pad),
                             lambda p, s: (s, p, 0)),
                # Loop-invariant weight stays in HBM; copied once per core into
                # single-buffered VMEM scratch inside the kernel.
                pl.BlockSpec(memory_space=pl.ANY),
            ],
            out_specs=[
                pl.BlockSpec((t_chunk, b_blk, h_pad), lambda p, s: (s, p, 0)),
                pl.BlockSpec((1, b_blk, h_pad), lambda p, s: (0, p, 0)),
                pl.BlockSpec((1, b_blk, h_pad), lambda p, s: (0, p, 0)),
            ],
            scratch_shapes=[
                pltpu.VMEM((b_blk, h_pad), jnp.float32),       # h state
                pltpu.VMEM((b_blk, h_pad), jnp.float32),       # c state
                pltpu.VMEM((h_pad, 4 * h_pad), cdt),           # W_hh (1x buffered)
                pltpu.SemaphoreType.DMA((1,)),
            ],
        ),
        compiler_params=pltpu.CompilerParams(
            # batch split shardable across TCs (v7x); time axis is serial.
            dimension_semantics=("parallel", "arbitrary"),
            vmem_limit_bytes=int(vmem_limit)),
    )(x_proj, w_hh_p)


# ------------------------------ model forward --------------------------------

def rnn_model_forward(tokens, params, *, compute_dtype=jnp.bfloat16,
                      _t_chunk=None):
    """tokens: (seq_len, batch) int32.  Returns (logits_f32, (h_n, c_n))."""
    seq, batch = tokens.shape
    embed_w = params["embed_w"]        # (ntoken, ninp)
    w_ih_t = params["w_ih_t"]          # (ninp, 4*nhid)
    w_hh_t = params["w_hh_t"]          # (nhid, 4*nhid)
    b_gates = params["b_gates"]        # (1, 4*nhid)
    w_dec_t = params["w_dec_t"]        # (nhid, ntoken)
    b_dec = params["b_dec"]            # (1, ntoken)

    ntoken, ninp = embed_w.shape
    nhid = w_hh_t.shape[0]

    cdt = jnp.dtype(compute_dtype)
    dt_bytes = cdt.itemsize
    sub_q = 16 if dt_bytes == 2 else 8          # bf16 packs 2 rows / sublane
    cfg = _tpu_config()

    # vreg-aligned padded sizes
    b_pad = _round_up(batch, sub_q)
    i_pad = _round_up(ninp, 128)
    h_pad = _round_up(nhid, 128)
    # Pad the vocab dim more aggressively when it is large so the decoder keeps
    # MXU-friendly lane tiles even for awkward ntoken.
    v_pad = _round_up(ntoken, 128 if ntoken <= 512 else 512)

    # Padded, gate-block-aligned parameters (zero padding is exact).  Weights
    # in the compute dtype (bf16 by default); biases stay f32 (added to the
    # f32 accumulator).
    w_ih_p = _pad2(_pad_gate_cols(w_ih_t, nhid, h_pad),
                   (i_pad, 4 * h_pad)).astype(cdt)
    w_hh_p = _pad2(_pad_gate_cols(w_hh_t, nhid, h_pad),
                   (h_pad, 4 * h_pad)).astype(cdt)
    b_gates_p = _pad_gate_cols(b_gates, nhid, h_pad).astype(jnp.float32)
    w_dec_p = _pad2(w_dec_t, (h_pad, v_pad)).astype(cdt)
    b_dec_p = _pad2(b_dec, (1, v_pad)).astype(jnp.float32)

    # VMEM-budgeted time chunk (generation aware); pad seq so it divides and
    # mask the padded timesteps inside the recurrence.
    n_bsplit = 2 if (cfg["two_tc"] and b_pad % (2 * sub_q) == 0) else 1
    b_blk = b_pad // n_bsplit
    t_chunk = (_t_chunk if _t_chunk is not None else
               _budget_t_chunk(seq, b_blk, h_pad, dt_bytes,
                               int(0.75 * cfg["lstm_vmem"])))
    seq_pad = _round_up(seq, t_chunk)

    # 1. Embedding lookup (glue) + eval-mode dropout (identity).  Pad the table
    #    columns and the token ids (cheap) instead of the full activation.
    # TODO(synk): fuse this gather into the x-projection kernel via scalar
    #             prefetch of `tokens` to avoid the HBM intermediate.
    embed_p = jnp.pad(embed_w, ((0, 0), (0, i_pad - ninp))).astype(cdt)
    tokens_p = jnp.pad(tokens, ((0, seq_pad - seq), (0, b_pad - batch)))
    emb = jnp.take(embed_p, tokens_p, axis=0)            # (seq_pad, b_pad, i_pad)

    # 2. Input projection, hoisted out of the recurrence (seq-parallel, K-tiled).
    x_proj = _matmul_bias(emb.reshape(seq_pad * b_pad, i_pad), w_ih_p, b_gates_p,
                          cdt, tm_target=cfg["tm"], tn_target=cfg["tn"],
                          tk_target=cfg["tk"], vmem_limit=cfg["proj_vmem"])
    x_proj = x_proj.reshape(seq_pad, b_pad, 4 * h_pad)

    # 3. Serial LSTM recurrence, chunked over time (+ batch split on v7x).
    h_seq, h_n, c_n = _lstm_scan(x_proj, w_hh_p, t_chunk=t_chunk,
                                 n_bsplit=n_bsplit, seq_len=seq,
                                 vmem_limit=cfg["lstm_vmem"])

    # 4. Decoder projection (seq-parallel, lane-dense f32 logits).
    logits = _matmul_bias(h_seq.reshape(seq_pad * b_pad, h_pad), w_dec_p, b_dec_p,
                          jnp.float32, tm_target=cfg["tm"], tn_target=cfg["tn"],
                          tk_target=cfg["tk"], vmem_limit=cfg["proj_vmem"])
    logits = logits.reshape(seq_pad, b_pad, v_pad)[:seq, :batch, :ntoken]

    h_n = h_n[:, :batch, :nhid]
    c_n = c_n[:, :batch, :nhid]
    return logits, (h_n, c_n)


# ----------------------------- reference / init ------------------------------

def _reference_forward(tokens, params):
    """Pure-JAX f32 reference (mirrors PyTorch eval-mode forward)."""
    embed_w = params["embed_w"]
    w_ih_t, w_hh_t = params["w_ih_t"], params["w_hh_t"]
    b_gates, w_dec_t, b_dec = params["b_gates"], params["w_dec_t"], params["b_dec"]
    nhid = w_hh_t.shape[0]
    batch = tokens.shape[1]

    emb = jnp.take(embed_w, tokens, axis=0)

    def step(carry, x_t):
        h, c = carry
        gates = x_t @ w_ih_t + h @ w_hh_t + b_gates
        i = jax.nn.sigmoid(gates[:, 0 * nhid:1 * nhid])
        f = jax.nn.sigmoid(gates[:, 1 * nhid:2 * nhid])
        g = jnp.tanh(gates[:, 2 * nhid:3 * nhid])
        o = jax.nn.sigmoid(gates[:, 3 * nhid:4 * nhid])
        c_new = f * c + i * g
        h_new = o * jnp.tanh(c_new)
        return (h_new, c_new), h_new

    h0 = jnp.zeros((batch, nhid), jnp.float32)
    (h_n, c_n), hs = lax.scan(step, (h0, h0), emb)
    logits = hs @ w_dec_t + b_dec
    return logits, (h_n[None], c_n[None])


def make_params(key, ntoken, ninp, nhid):
    """Deterministic parameter init mimicking the PyTorch module's init."""
    k_embed, k_dec, k_wih, k_whh, k_bih, k_bhh = jax.random.split(key, 6)
    initrange = 0.1
    stdv = 1.0 / jnp.sqrt(jnp.float32(nhid))   # PyTorch LSTM default init range

    embed_w = jax.random.uniform(k_embed, (ntoken, ninp), jnp.float32,
                                 -initrange, initrange)
    w_dec = jax.random.uniform(k_dec, (ntoken, nhid), jnp.float32,
                               -initrange, initrange)
    b_dec = jnp.zeros((1, ntoken), jnp.float32)

    w_ih = jax.random.uniform(k_wih, (4 * nhid, ninp), jnp.float32, -stdv, stdv)
    w_hh = jax.random.uniform(k_whh, (4 * nhid, nhid), jnp.float32, -stdv, stdv)
    b_ih = jax.random.uniform(k_bih, (4 * nhid,), jnp.float32, -stdv, stdv)
    b_hh = jax.random.uniform(k_bhh, (4 * nhid,), jnp.float32, -stdv, stdv)

    return {
        "embed_w": embed_w,
        "w_ih_t": w_ih.T,                       # (ninp, 4*nhid), gates i,f,g,o
        "w_hh_t": w_hh.T,                       # (nhid, 4*nhid)
        "b_gates": (b_ih + b_hh)[None, :],      # (1, 4*nhid)
        "w_dec_t": w_dec.T,                     # (nhid, ntoken)
        "b_dec": b_dec,                         # (1, ntoken)
    }


if __name__ == "__main__":
    # Small shapes consistent with the module: ntoken=64, ninp=32, nhid=32,
    # agenda_dim=0, nlayers=1, seq_len=8, batch=4.
    ntoken, ninp, nhid = 64, 32, 32
    seq_len, batch = 8, 4

    key = jax.random.PRNGKey(0)
    k_params, k_tok = jax.random.split(key)
    params = make_params(k_params, ntoken, ninp, nhid)
    tokens = jax.random.randint(k_tok, (seq_len, batch), 0, ntoken,
                                dtype=jnp.int32)

    ref_logits, (ref_h, ref_c) = _reference_forward(tokens, params)

    # f32 path: exact check of the padding / kernel structure.
    logits32, (h32, c32) = rnn_model_forward(tokens, params,
                                             compute_dtype=jnp.float32)
    jax.block_until_ready((logits32, h32, c32))
    assert logits32.shape == (seq_len, batch, ntoken)
    assert h32.shape == (1, batch, nhid) and c32.shape == (1, batch, nhid)
    assert jnp.allclose(logits32, ref_logits, atol=1e-4, rtol=1e-4)
    assert jnp.allclose(h32, ref_h, atol=1e-4, rtol=1e-4)
    assert jnp.allclose(c32, ref_c, atol=1e-4, rtol=1e-4)

    # f32 path with a non-dividing time chunk: exercises seq padding + masking.
    logits_m, (h_m, c_m) = rnn_model_forward(tokens, params,
                                             compute_dtype=jnp.float32,
                                             _t_chunk=3)
    jax.block_until_ready((logits_m, h_m, c_m))
    assert jnp.allclose(logits_m, ref_logits, atol=1e-4, rtol=1e-4)
    assert jnp.allclose(h_m, ref_h, atol=1e-4, rtol=1e-4)
    assert jnp.allclose(c_m, ref_c, atol=1e-4, rtol=1e-4)

    # bf16 production datapath (bf16 weights/activations, f32 accumulation and
    # f32 recurrent state) against the f32 reference, looser tolerance.
    logits, (h_n, c_n) = rnn_model_forward(tokens, params,
                                           compute_dtype=jnp.bfloat16)
    jax.block_until_ready((logits, h_n, c_n))
    assert logits.shape == (seq_len, batch, ntoken)
    assert jnp.allclose(logits, ref_logits, atol=5e-2, rtol=5e-2)
    assert jnp.allclose(h_n, ref_h, atol=5e-2, rtol=5e-2)
    assert jnp.allclose(c_n, ref_c, atol=5e-2, rtol=5e-2)

    print("KERNEL_OK")
</pallas_src>

<mosaic_0001>
module attributes {stable_mosaic.version = 11 : i64} {
  func.func @_proj_kernel(%arg0: i32, %arg1: i32, %arg2: i32, %arg3: memref<64x128xf32, #tpu.memory_space<vmem>>, %arg4: memref<128x512xf32, #tpu.memory_space<vmem>>, %arg5: memref<1x512xf32, #tpu.memory_space<vmem>>, %arg6: memref<64x512xf32, #tpu.memory_space<vmem>>, %arg7: memref<64x512xf32, #tpu.memory_space<vmem>>) attributes {dimension_semantics = [#tpu.dimension_semantics<parallel>, #tpu.dimension_semantics<parallel>, #tpu.dimension_semantics<arbitrary>], iteration_bounds = array<i64: 1, 1, 1>, scalar_prefetch = 0 : i64, scratch_operands = 1 : i64, tpu.core_type = #tpu.core_type<tc>, window_params = [{transform_indices = @transform_0, window_bounds = array<i64: 64, 128>}, {transform_indices = @transform_1, window_bounds = array<i64: 128, 512>}, {transform_indices = @transform_2, window_bounds = array<i64: 1, 512>}, {transform_indices = @transform_3, window_bounds = array<i64: 64, 512>}]} {
    %c0_i32 = arith.constant 0 : i32
    %0 = arith.cmpi eq, %arg2, %c0_i32 : i32
    %1 = arith.extui %0 : i1 to i32
    %c0_i32_0 = arith.constant 0 : i32
    %2 = arith.cmpi ne, %1, %c0_i32_0 : i32
    scf.if %2 {
      %cst_10 = arith.constant 0.000000e+00 : f32
      %12 = vector.broadcast %cst_10 : f32 to vector<64x512xf32>
      %c0_11 = arith.constant 0 : index
      %c0_12 = arith.constant 0 : index
      %13 = vector.load %arg7[%c0_11, %c0_12] : memref<64x512xf32, #tpu.memory_space<vmem>>, vector<64x512xf32>
      tpu.vector_store %arg7[%c0_11, %c0_12], %12 {strides = array<i32>} : memref<64x512xf32, #tpu.memory_space<vmem>>, vector<64x512xf32>,
    } else {
    }
    %c0 = arith.constant 0 : index
    %c0_1 = arith.constant 0 : index
    %3 = vector.load %arg7[%c0, %c0_1] : memref<64x512xf32, #tpu.memory_space<vmem>>, vector<64x512xf32>
    %c0_2 = arith.constant 0 : index
    %c0_3 = arith.constant 0 : index
    %4 = vector.load %arg3[%c0_2, %c0_3] : memref<64x128xf32, #tpu.memory_space<vmem>>, vector<64x128xf32>
    %c0_4 = arith.constant 0 : index
    %c0_5 = arith.constant 0 : index
    %5 = vector.load %arg4[%c0_4, %c0_5] : memref<128x512xf32, #tpu.memory_space<vmem>>, vector<128x512xf32>
    %cst = arith.constant dense<0.000000e+00> : vector<64x512xf32>
    %6 = tpu.matmul %4, %5, %cst {dimension_numbers = #tpu.dot_dimension_numbers<[1], [0], [0], [1], [0, 0, 1, 1], [], []>} : vector<64x128xf32>, vector<128x512xf32>, vector<64x512xf32> -> vector<64x512xf32>
    %7 = arith.addf %3, %6 : vector<64x512xf32>
    %c0_6 = arith.constant 0 : index
    %c0_7 = arith.constant 0 : index
    %8 = vector.load %arg7[%c0_6, %c0_7] : memref<64x512xf32, #tpu.memory_space<vmem>>, vector<64x512xf32>
    tpu.vector_store %arg7[%c0_6, %c0_7], %7 {strides = array<i32>} : memref<64x512xf32, #tpu.memory_space<vmem>>, vector<64x512xf32>,
    %c0_i32_8 = arith.constant 0 : i32
    %9 = arith.cmpi eq, %arg2, %c0_i32_8 : i32
    %10 = arith.extui %9 : i1 to i32
    %c0_i32_9 = arith.constant 0 : i32
    %11 = arith.cmpi ne, %10, %c0_i32_9 : i32
    scf.if %11 {
      %c0_10 = arith.constant 0 : index
      %c0_11 = arith.constant 0 : index
      %12 = vector.load %arg7[%c0_10, %c0_11] : memref<64x512xf32, #tpu.memory_space<vmem>>, vector<64x512xf32>
      %c0_12 = arith.constant 0 : index
      %c0_13 = arith.constant 0 : index
      %13 = vector.load %arg5[%c0_12, %c0_13] : memref<1x512xf32, #tpu.memory_space<vmem>>, vector<1x512xf32>
      %14 = vector.broadcast %13 : vector<1x512xf32> to vector<64x512xf32>
      %15 = arith.addf %12, %14 : vector<64x512xf32>
      %c0_14 = arith.constant 0 : index
      %c0_15 = arith.constant 0 : index
      %16 = vector.load %arg6[%c0_14, %c0_15] : memref<64x512xf32, #tpu.memory_space<vmem>>, vector<64x512xf32>
      tpu.vector_store %arg6[%c0_14, %c0_15], %15 {strides = array<i32>} : memref<64x512xf32, #tpu.memory_space<vmem>>, vector<64x512xf32>,
    } else {
    }
    return
  }
  func.func @transform_0(%arg0: i32, %arg1: i32, %arg2: i32) -> (i32, i32) {
    %c0_i32 = arith.constant 0 : i32
    return %arg0, %arg2 : i32, i32
  }
  func.func @transform_1(%arg0: i32, %arg1: i32, %arg2: i32) -> (i32, i32) {
    %c0_i32 = arith.constant 0 : i32
    return %arg2, %arg1 : i32, i32
  }
  func.func @transform_2(%arg0: i32, %arg1: i32, %arg2: i32) -> (i32, i32) {
    %c0_i32 = arith.constant 0 : i32
    %c0_i32_0 = arith.constant 0 : i32
    return %c0_i32, %arg1 : i32, i32
  }
  func.func @transform_3(%arg0: i32, %arg1: i32, %arg2: i32) -> (i32, i32) {
    %c0_i32 = arith.constant 0 : i32
    return %arg0, %arg1 : i32, i32
  }
}

</mosaic_0001>

<llo_original>
// kernel: tpu_custom_call.1
$region0: #{tpu_custom_call.1}
  #allocation0 [shape = 'u32[]', space=smem, size = 0x4, offset = 0x4, fixed_abs, tag = 'smem constant byte address 0x4 - core index']
  #allocation1 [shape = 'u32[144,128]{1,0:T(1,128)}', space=vmem, size = 0x12000, scoped, tag = 'internal scratch']
  #allocation2 [shape = 'f32[64,512]{1,0:T(8,128)}', space=vmem, size = 0x20000, scoped, tag = 'scratch operand']
  %s0 = inlined_call_operand.hbm [shape: f32[64,128], index: 0, kind: input, shape index: {}]
  %s1 = inlined_call_operand.hbm [shape: f32[128,512], index: 1, kind: input, shape index: {}]
  %s2 = inlined_call_operand.vmem [shape: f32[1,512], index: 2, kind: input, shape index: {}]
  %s3 = inlined_call_operand.hbm [shape: f32[64,512], index: 3, kind: output, shape index: {}]
  %s4 = sld [smem:[#allocation0]]
  $region38: #{tpu_custom_call.1} parent=0
    _
  %s6 = ssub.s32 1, %s4
  %s7 = scalar_select 0, %s6, %s4
  $region1: #{tpu_custom_call.1} parent=0
    #allocation3 [shape = 'u8[32768]{0}', space=vmem, size = 0x8000, scoped, tag = 'input window, operand 0, single buffered']
    #allocation4 [shape = 's32[1]{0}', space=sflag, size = 0x4, scoped, tag = 'scoped memory for tpu_custom_call.1']
    #allocation5 [shape = 's32[1]{0}', space=sflag, size = 0x4, scoped, tag = 'scoped memory for tpu_custom_call.1']
    #allocation6 [shape = 'u8[262144]{0}', space=vmem, size = 0x40000, scoped, tag = 'input window, operand 1, single buffered']
    #allocation7 [shape = 's32[1]{0}', space=sflag, size = 0x4, scoped, tag = 'scoped memory for tpu_custom_call.1']
    #allocation8 [shape = 'u8[131072]{0}', space=vmem, size = 0x20000, scoped, tag = 'output window, operand 0, single buffered']
    %8 = vsyncpa [#allocation4], 0
    %9 = vsyncpa [#allocation7], 0
    %10 = vsyncpa [#allocation5], 0
    // Predicated region
    $region2: #{tpu_custom_call.1} parent=1 // pred_check
      _
    $region3: #{tpu_custom_call.1} parent=1 // pred_check_branch
      %12 = sbr.rel (0) target = $region5
    $region4: #{tpu_custom_call.1} parent=1 // pred_region
      %s14 = ssub.s32 1024, 1024
      %15 = vsyncadd [#allocation4], %s14
      %s16 = sshll.u32 [#allocation3], 4
      %s17 = int_to_ptr.vmem [resolvable:$true] %s16
      %22 = dma.hbm_to_vmem [thread:$0]  %s0, 1024, %s17, [#allocation4], 128, 128, 8
    $region5: #{tpu_custom_call.1} parent=1 // pred_fallthru
      _
    // Predicated region
    $region6: #{tpu_custom_call.1} parent=1 // pred_check
      _
    $region7: #{tpu_custom_call.1} parent=1 // pred_check_branch
      %24 = sbr.rel (0) target = $region9
    $region8: #{tpu_custom_call.1} parent=1 // pred_region
      %s26 = ssub.s32 8192, 8192
      %27 = vsyncadd [#allocation7], %s26
      %s28 = sshll.u32 [#allocation6], 4
      %s29 = int_to_ptr.vmem [resolvable:$true] %s28
      %34 = dma.hbm_to_vmem [thread:$0]  %s1, 8192, %s29, [#allocation7], 512, 512, 32
    $region9: #{tpu_custom_call.1} parent=1 // pred_fallthru
      _
    // Predicated region
    $region10: #{tpu_custom_call.1} parent=1 // pred_check
      _
    $region11: #{tpu_custom_call.1} parent=1 // pred_check_branch
      %36 = sbr.rel (0) target = $region13
    $region12: #{tpu_custom_call.1} parent=1 // pred_region
      _
    $region13: #{tpu_custom_call.1} parent=1 // pred_fallthru
      _
    // Predicated region
    $region14: #{tpu_custom_call.1} parent=1 // pred_check
      _
    $region15: #{tpu_custom_call.1} parent=1 // pred_check_branch
      %38 = sbr.rel (0) target = $region17
    $region16: #{tpu_custom_call.1} parent=1 // pred_region
      %39 = dma.done [#allocation4], 1024
    $region17: #{tpu_custom_call.1} parent=1 // pred_fallthru
      _
    // Predicated region
    $region18: #{tpu_custom_call.1} parent=1 // pred_check
      _
    $region19: #{tpu_custom_call.1} parent=1 // pred_check_branch
      %41 = sbr.rel (0) target = $region21
    $region20: #{tpu_custom_call.1} parent=1 // pred_region
      %42 = dma.done [#allocation7], 8192
    $region21: #{tpu_custom_call.1} parent=1 // pred_fallthru
      _
    %p43 = scmp.eq.s32.totalorder 0, 0
    // Predicated region
    $region22: #{tpu_custom_call.1} parent=1 // pred_check
      %p44 = pneg %p43
    $region23: #{tpu_custom_call.1} parent=1 // pred_check_branch
      %46 = sbr.rel (%p44) target = $region25
    $region24: #{tpu_custom_call.1} parent=1 // pred_region
      %47 = vst [vmem:[#allocation2] sm:$0xff] 0.0
      %48 = vst [vmem:[#allocation2 + $0x8] sm:$0xff] 0.0
      %49 = vst [vmem:[#allocation2 + $0x10] sm:$0xff] 0.0
      %50 = vst [vmem:[#allocation2 + $0x18] sm:$0xff] 0.0
      %51 = vst [vmem:[#allocation2 + $0x20] sm:$0xff] 0.0
      %52 = vst [vmem:[#allocation2 + $0x28] sm:$0xff] 0.0
      %53 = vst [vmem:[#allocation2 + $0x30] sm:$0xff] 0.0
      %54 = vst [vmem:[#allocation2 + $0x38] sm:$0xff] 0.0
      %55 = vst [vmem:[#allocation2 + $0x40] sm:$0xff] 0.0
      %56 = vst [vmem:[#allocation2 + $0x48] sm:$0xff] 0.0
      %57 = vst [vmem:[#allocation2 + $0x50] sm:$0xff] 0.0
      %58 = vst [vmem:[#allocation2 + $0x58] sm:$0xff] 0.0
      %59 = vst [vmem:[#allocation2 + $0x60] sm:$0xff] 0.0
      %60 = vst [vmem:[#allocation2 + $0x68] sm:$0xff] 0.0
      %61 = vst [vmem:[#allocation2 + $0x70] sm:$0xff] 0.0
      %62 = vst [vmem:[#allocation2 + $0x78] sm:$0xff] 0.0
      %63 = vst [vmem:[#allocation2 + $0x80] sm:$0xff] 0.0
      %64 = vst [vmem:[#allocation2 + $0x88] sm:$0xff] 0.0
      %65 = vst [vmem:[#allocation2 + $0x90] sm:$0xff] 0.0
      %66 = vst [vmem:[#allocation2 + $0x98] sm:$0xff] 0.0
      %67 = vst [vmem:[#allocation2 + $0xa0] sm:$0xff] 0.0
      %68 = vst [vmem:[#allocation2 + $0xa8] sm:$0xff] 0.0
      %69 = vst [vmem:[#allocation2 + $0xb0] sm:$0xff] 0.0
      %70 = vst [vmem:[#allocation2 + $0xb8] sm:$0xff] 0.0
      %71 = vst [vmem:[#allocation2 + $0xc0] sm:$0xff] 0.0
      %72 = vst [vmem:[#allocation2 + $0xc8] sm:$0xff] 0.0
      %73 = vst [vmem:[#allocation2 + $0xd0] sm:$0xff] 0.0
      %74 = vst [vmem:[#allocation2 + $0xd8] sm:$0xff] 0.0
      %75 = vst [vmem:[#allocation2 + $0xe0] sm:$0xff] 0.0
      %76 = vst [vmem:[#allocation2 + $0xe8] sm:$0xff] 0.0
      %77 = vst [vmem:[#allocation2 + $0xf0] sm:$0xff] 0.0
      %78 = vst [vmem:[#allocation2 + $0xf8] sm:$0xff] 0.0
    $region25: #{tpu_custom_call.1} parent=1 // pred_fallthru
      _
    %v79 = vld [vmem:[#allocation2] sm:$0xff]
    %v80 = vld [vmem:[#allocation2 + $0x8] sm:$0xff]
    %v81 = vld [vmem:[#allocation2 + $0x10] sm:$0xff]
    %v82 = vld [vmem:[#allocation2 + $0x18] sm:$0xff]
    %v83 = vld [vmem:[#allocation2 + $0x20] sm:$0xff]
    %v84 = vld [vmem:[#allocation2 + $0x28] sm:$0xff]
    %v85 = vld [vmem:[#allocation2 + $0x30] sm:$0xff]
    %v86 = vld [vmem:[#allocation2 + $0x38] sm:$0xff]
    %v87 = vld [vmem:[#allocation2 + $0x40] sm:$0xff]
    %v88 = vld [vmem:[#allocation2 + $0x48] sm:$0xff]
    %v89 = vld [vmem:[#allocation2 + $0x50] sm:$0xff]
    %v90 = vld [vmem:[#allocation2 + $0x58] sm:$0xff]
    %v91 = vld [vmem:[#allocation2 + $0x60] sm:$0xff]
    %v92 = vld [vmem:[#allocation2 + $0x68] sm:$0xff]
    %v93 = vld [vmem:[#allocation2 + $0x70] sm:$0xff]
    %v94 = vld [vmem:[#allocation2 + $0x78] sm:$0xff]
    %v95 = vld [vmem:[#allocation2 + $0x80] sm:$0xff]
    %v96 = vld [vmem:[#allocation2 + $0x88] sm:$0xff]
    %v97 = vld [vmem:[#allocation2 + $0x90] sm:$0xff]
    %v98 = vld [vmem:[#allocation2 + $0x98] sm:$0xff]
    %v99 = vld [vmem:[#allocation2 + $0xa0] sm:$0xff]
    %v100 = vld [vmem:[#allocation2 + $0xa8] sm:$0xff]
    %v101 = vld [vmem:[#allocation2 + $0xb0] sm:$0xff]
    %v102 = vld [vmem:[#allocation2 + $0xb8] sm:$0xff]
    %v103 = vld [vmem:[#allocation2 + $0xc0] sm:$0xff]
    %v104 = vld [vmem:[#allocation2 + $0xc8] sm:$0xff]
    %v105 = vld [vmem:[#allocation2 + $0xd0] sm:$0xff]
    %v106 = vld [vmem:[#allocation2 + $0xd8] sm:$0xff]
    %v107 = vld [vmem:[#allocation2 + $0xe0] sm:$0xff]
    %v108 = vld [vmem:[#allocation2 + $0xe8] sm:$0xff]
    %v109 = vld [vmem:[#allocation2 + $0xf0] sm:$0xff]
    %v110 = vld [vmem:[#allocation2 + $0xf8] sm:$0xff]
    %v111 = vld [vmem:[#allocation3] sm:$0xff]
    %v112 = vld [vmem:[#allocation3 + $0x8] sm:$0xff]
    %v113 = vld [vmem:[#allocation3 + $0x10] sm:$0xff]
    %v114 = vld [vmem:[#allocation3 + $0x18] sm:$0xff]
    %v115 = vld [vmem:[#allocation3 + $0x20] sm:$0xff]
    %v116 = vld [vmem:[#allocation3 + $0x28] sm:$0xff]
    %v117 = vld [vmem:[#allocation3 + $0x30] sm:$0xff]
    %v118 = vld [vmem:[#allocation3 + $0x38] sm:$0xff]
    %v119 = vld [vmem:[#allocation6] sm:$0xff]
    %v120 = vld [vmem:[#allocation6 + $0x8] sm:$0xff]
    %v121 = vld [vmem:[#allocation6 + $0x10] sm:$0xff]
    %v122 = vld [vmem:[#allocation6 + $0x18] sm:$0xff]
    %v123 = vld [vmem:[#allocation6 + $0x20] sm:$0xff]
    %v124 = vld [vmem:[#allocation6 + $0x28] sm:$0xff]
    %v125 = vld [vmem:[#allocation6 + $0x30] sm:$0xff]
    %v126 = vld [vmem:[#allocation6 + $0x38] sm:$0xff]
    %v127 = vld [vmem:[#allocation6 + $0x40] sm:$0xff]
    %v128 = vld [vmem:[#allocation6 + $0x48] sm:$0xff]
    %v129 = vld [vmem:[#allocation6 + $0x50] sm:$0xff]
    %v130 = vld [vmem:[#allocation6 + $0x58] sm:$0xff]
    %v131 = vld [vmem:[#allocation6 + $0x60] sm:$0xff]
    %v132 = vld [vmem:[#allocation6 + $0x68] sm:$0xff]
    %v133 = vld [vmem:[#allocation6 + $0x70] sm:$0xff]
    %v134 = vld [vmem:[#allocation6 + $0x78] sm:$0xff]
    %v135 = vld [vmem:[#allocation6 + $0x80] sm:$0xff]
    %v136 = vld [vmem:[#allocation6 + $0x88] sm:$0xff]
    %v137 = vld [vmem:[#allocation6 + $0x90] sm:$0xff]
    %v138 = vld [vmem:[#allocation6 + $0x98] sm:$0xff]
    %v139 = vld [vmem:[#allocation6 + $0xa0] sm:$0xff]
    %v140 = vld [vmem:[#allocation6 + $0xa8] sm:$0xff]
    %v141 = vld [vmem:[#allocation6 + $0xb0] sm:$0xff]
    %v142 = vld [vmem:[#allocation6 + $0xb8] sm:$0xff]
    %v143 = vld [vmem:[#allocation6 + $0xc0] sm:$0xff]
    %v144 = vld [vmem:[#allocation6 + $0xc8] sm:$0xff]
    %v145 = vld [vmem:[#allocation6 + $0xd0] sm:$0xff]
    %v146 = vld [vmem:[#allocation6 + $0xd8] sm:$0xff]
    %v147 = vld [vmem:[#allocation6 + $0xe0] sm:$0xff]
    %v148 = vld [vmem:[#allocation6 + $0xe8] sm:$0xff]
    %v149 = vld [vmem:[#allocation6 + $0xf0] sm:$0xff]
    %v150 = vld [vmem:[#allocation6 + $0xf8] sm:$0xff]
    %v151 = vld [vmem:[#allocation6 + $0x100] sm:$0xff]
    %v152 = vld [vmem:[#allocation6 + $0x108] sm:$0xff]
    %v153 = vld [vmem:[#allocation6 + $0x110] sm:$0xff]
    %v154 = vld [vmem:[#allocation6 + $0x118] sm:$0xff]
    %v155 = vld [vmem:[#allocation6 + $0x120] sm:$0xff]
    %v156 = vld [vmem:[#allocation6 + $0x128] sm:$0xff]
    %v157 = vld [vmem:[#allocation6 + $0x130] sm:$0xff]
    %v158 = vld [vmem:[#allocation6 + $0x138] sm:$0xff]
    %v159 = vld [vmem:[#allocation6 + $0x140] sm:$0xff]
    %v160 = vld [vmem:[#allocation6 + $0x148] sm:$0xff]
    %v161 = vld [vmem:[#allocation6 + $0x150] sm:$0xff]
    %v162 = vld [vmem:[#allocation6 + $0x158] sm:$0xff]
    %v163 = vld [vmem:[#allocation6 + $0x160] sm:$0xff]
    %v164 = vld [vmem:[#allocation6 + $0x168] sm:$0xff]
    %v165 = vld [vmem:[#allocation6 + $0x170] sm:$0xff]
    %v166 = vld [vmem:[#allocation6 + $0x178] sm:$0xff]
    %v167 = vld [vmem:[#allocation6 + $0x180] sm:$0xff]
    %v168 = vld [vmem:[#allocation6 + $0x188] sm:$0xff]
    %v169 = vld [vmem:[#allocation6 + $0x190] sm:$0xff]
    %v170 = vld [vmem:[#allocation6 + $0x198] sm:$0xff]
    %v171 = vld [vmem:[#allocation6 + $0x1a0] sm:$0xff]
    %v172 = vld [vmem:[#allocation6 + $0x1a8] sm:$0xff]
    %v173 = vld [vmem:[#allocation6 + $0x1b0] sm:$0xff]
    %v174 = vld [vmem:[#allocation6 + $0x1b8] sm:$0xff]
    %v175 = vld [vmem:[#allocation6 + $0x1c0] sm:$0xff]
    %v176 = vld [vmem:[#allocation6 + $0x1c8] sm:$0xff]
    %v177 = vld [vmem:[#allocation6 + $0x1d0] sm:$0xff]
    %v178 = vld [vmem:[#allocation6 + $0x1d8] sm:$0xff]
    %v179 = vld [vmem:[#allocation6 + $0x1e0] sm:$0xff]
    %v180 = vld [vmem:[#allocation6 + $0x1e8] sm:$0xff]
    %v181 = vld [vmem:[#allocation6 + $0x1f0] sm:$0xff]
    %v182 = vld [vmem:[#allocation6 + $0x1f8] sm:$0xff]
    %183 = vmatprep.subr.mxu0 %v120
    %184 = vmatpush1.msra.mxu0 %v119
    %185 = vmatprep.subr.mxu0 %v124
    %186 = vmatpush1.msra.mxu0 %v123
    %187 = vmatprep.subr.mxu0 %v128
    %188 = vmatpush1.msra.mxu0 %v127
    %189 = vmatprep.subr.mxu0 %v132
    %190 = vmatpush1.msra.mxu0 %v131
    %191 = vmatprep.subr.mxu0 %v136
    %192 = vmatpush1.msra.mxu0 %v135
    %193 = vmatprep.subr.mxu0 %v140
    %194 = vmatpush1.msra.mxu0 %v139
    %195 = vmatprep.subr.mxu0 %v144
    %196 = vmatpush1.msra.mxu0 %v143
    %197 = vmatprep.subr.mxu0 %v148
    %198 = vmatpush1.msra.mxu0 %v147
    %199 = vmatprep.subr.mxu0 %v152
    %200 = vmatpush1.msra.mxu0 %v151
    %201 = vmatprep.subr.mxu0 %v156
    %202 = vmatpush1.msra.mxu0 %v155
    %203 = vmatprep.subr.mxu0 %v160
    %204 = vmatpush1.msra.mxu0 %v159
    %205 = vmatprep.subr.mxu0 %v164
    %206 = vmatpush1.msra.mxu0 %v163
    %207 = vmatprep.subr.mxu0 %v168
    %208 = vmatpush1.msra.mxu0 %v167
    %209 = vmatprep.subr.mxu0 %v172
    %210 = vmatpush1.msra.mxu0 %v171
    %211 = vmatprep.subr.mxu0 %v176
    %212 = vmatpush1.msra.mxu0 %v175
    %213 = vmatprep.subr.mxu0 %v180
    %214 = vmatpush1.msra.mxu0 %v179
    %215 = vmatprep.subr.mxu0 0.0
    %216 = vmatpush1.msra.mxu0 0.0
    %217 = vmatprep.subr.mxu0 0.0
    %218 = vmatpush1.msra.mxu0 0.0
    %219 = vmatprep.subr.mxu0 0.0
    %220 = vmatpush1.msra.mxu0 0.0
    %221 = vmatprep.subr.mxu0 0.0
    %222 = vmatpush1.msra.mxu0 0.0
    %223 = vmatprep.subr.mxu0 0.0
    %224 = vmatpush1.msra.mxu0 0.0
    %225 = vmatprep.subr.mxu0 0.0
    %226 = vmatpush1.msra.mxu0 0.0
    %227 = vmatprep.subr.mxu0 0.0
    %228 = vmatpush1.msra.mxu0 0.0
    %229 = vmatprep.subr.mxu0 0.0
    %230 = vmatpush1.msra.mxu0 0.0
    %231 = vmatprep.subr.mxu0 0.0
    %232 = vmatpush1.msra.mxu0 0.0
    %233 = vmatprep.subr.mxu0 0.0
    %234 = vmatpush1.msra.mxu0 0.0
    %235 = vmatprep.subr.mxu0 0.0
    %236 = vmatpush1.msra.mxu0 0.0
    %237 = vmatprep.subr.mxu0 0.0
    %238 = vmatpush1.msra.mxu0 0.0
    %239 = vmatprep.subr.mxu0 0.0
    %240 = vmatpush1.msra.mxu0 0.0
    %241 = vmatprep.subr.mxu0 0.0
    %242 = vmatpush1.msra.mxu0 0.0
    %243 = vmatprep.subr.mxu0 0.0
    %244 = vmatpush1.msra.mxu0 0.0
    %245 = vmatprep.subr.mxu0 0.0
    %246 = vmatpush1.msra.mxu0 0.0
    %247 = vmatprep.mubr.f32.mxu0 0.0
    %248 = vmatmul.mubr.f32.gmra.mrb[0].mxu0 %v111
    %v249 = vpop.f32.mrb[0].mxu0
    %v250 = vadd.f32 0.0, %v249
    %v251 = vpop.f32.mrb[0].mxu0
    %v252 = vadd.f32 0.0, %v251
    %253 = vmatprep.mubr.f32.mxu0 0.0
    %254 = vmatmul.mubr.f32.gmra.mrb[0].mxu0 %v112
    %v255 = vpop.f32.mrb[0].mxu0
    %v256 = vadd.f32 0.0, %v255
    %v257 = vpop.f32.mrb[0].mxu0
    %v258 = vadd.f32 0.0, %v257
    %259 = vmatprep.mubr.f32.mxu0 0.0
    %260 = vmatmul.mubr.f32.gmra.mrb[0].mxu0 %v113
    %v261 = vpop.f32.mrb[0].mxu0
    %v262 = vadd.f32 0.0, %v261
    %v263 = vpop.f32.mrb[0].mxu0
    %v264 = vadd.f32 0.0, %v263
    %265 = vmatprep.mubr.f32.mxu0 0.0
    %266 = vmatmul.mubr.f32.gmra.mrb[0].mxu0 %v114
    %v267 = vpop.f32.mrb[0].mxu0
    %v268 = vadd.f32 0.0, %v267
    %v269 = vpop.f32.mrb[0].mxu0
    %v270 = vadd.f32 0.0, %v269
    %271 = vmatprep.mubr.f32.mxu0 0.0
    %272 = vmatmul.mubr.f32.gmra.mrb[0].mxu0 %v115
    %v273 = vpop.f32.mrb[0].mxu0
    %v274 = vadd.f32 0.0, %v273
    %v275 = vpop.f32.mrb[0].mxu0
    %v276 = vadd.f32 0.0, %v275
    %277 = vmatprep.mubr.f32.mxu0 0.0
    %278 = vmatmul.mubr.f32.gmra.mrb[0].mxu0 %v116
    %v279 = vpop.f32.mrb[0].mxu0
    %v280 = vadd.f32 0.0, %v279
    %v281 = vpop.f32.mrb[0].mxu0
    %v282 = vadd.f32 0.0, %v281
    %283 = vmatprep.mubr.f32.mxu0 0.0
    %284 = vmatmul.mubr.f32.gmra.mrb[0].mxu0 %v117
    %v285 = vpop.f32.mrb[0].mxu0
    %v286 = vadd.f32 0.0, %v285
    %v287 = vpop.f32.mrb[0].mxu0
    %v288 = vadd.f32 0.0, %v287
    %289 = vmatprep.mubr.f32.mxu0 0.0
    %290 = vmatmul.mubr.f32.gmra.mrb[0].mxu0 %v118
    %v291 = vpop.f32.mrb[0].mxu0
    %v292 = vadd.f32 0.0, %v291
    %v293 = vpop.f32.mrb[0].mxu0
    %v294 = vadd.f32 0.0, %v293
    %295 = vdwg.mxu0
    %296 = vmatprep.subr.mxu0 %v122
    %297 = vmatpush1.msra.mxu0 %v121
    %298 = vmatprep.subr.mxu0 %v126
    %299 = vmatpush1.msra.mxu0 %v125
    %300 = vmatprep.subr.mxu0 %v130
    %301 = vmatpush1.msra.mxu0 %v129
    %302 = vmatprep.subr.mxu0 %v134
    %303 = vmatpush1.msra.mxu0 %v133
    %304 = vmatprep.subr.mxu0 %v138
    %305 = vmatpush1.msra.mxu0 %v137
    %306 = vmatprep.subr.mxu0 %v142
    %307 = vmatpush1.msra.mxu0 %v141
    %308 = vmatprep.subr.mxu0 %v146
    %309 = vmatpush1.msra.mxu0 %v145
    %310 = vmatprep.subr.mxu0 %v150
    %311 = vmatpush1.msra.mxu0 %v149
    %312 = vmatprep.subr.mxu0 %v154
    %313 = vmatpush1.msra.mxu0 %v153
    %314 = vmatprep.subr.mxu0 %v158
    %315 = vmatpush1.msra.mxu0 %v157
    %316 = vmatprep.subr.mxu0 %v162
    %317 = vmatpush1.msra.mxu0 %v161
    %318 = vmatprep.subr.mxu0 %v166
    %319 = vmatpush1.msra.mxu0 %v165
    %320 = vmatprep.subr.mxu0 %v170
    %321 = vmatpush1.msra.mxu0 %v169
    %322 = vmatprep.subr.mxu0 %v174
    %323 = vmatpush1.msra.mxu0 %v173
    %324 = vmatprep.subr.mxu0 %v178
    %325 = vmatpush1.msra.mxu0 %v177
    %326 = vmatprep.subr.mxu0 %v182
    %327 = vmatpush1.msra.mxu0 %v181
    %328 = vmatprep.subr.mxu0 0.0
    %329 = vmatpush1.msra.mxu0 0.0
    %330 = vmatprep.subr.mxu0 0.0
    %331 = vmatpush1.msra.mxu0 0.0
    %332 = vmatprep.subr.mxu0 0.0
    %333 = vmatpush1.msra.mxu0 0.0
    %334 = vmatprep.subr.mxu0 0.0
    %335 = vmatpush1.msra.mxu0 0.0
    %336 = vmatprep.subr.mxu0 0.0
    %337 = vmatpush1.msra.mxu0 0.0
    %338 = vmatprep.subr.mxu0 0.0
    %339 = vmatpush1.msra.mxu0 0.0
    %340 = vmatprep.subr.mxu0 0.0
    %341 = vmatpush1.msra.mxu0 0.0
    %342 = vmatprep.subr.mxu0 0.0
    %343 = vmatpush1.msra.mxu0 0.0
    %344 = vmatprep.subr.mxu0 0.0
    %345 = vmatpush1.msra.mxu0 0.0
    %346 = vmatprep.subr.mxu0 0.0
    %347 = vmatpush1.msra.mxu0 0.0
    %348 = vmatprep.subr.mxu0 0.0
    %349 = vmatpush1.msra.mxu0 0.0
    %350 = vmatprep.subr.mxu0 0.0
    %351 = vmatpush1.msra.mxu0 0.0
    %352 = vmatprep.subr.mxu0 0.0
    %353 = vmatpush1.msra.mxu0 0.0
    %354 = vmatprep.subr.mxu0 0.0
    %355 = vmatpush1.msra.mxu0 0.0
    %356 = vmatprep.subr.mxu0 0.0
    %357 = vmatpush1.msra.mxu0 0.0
    %358 = vmatprep.subr.mxu0 0.0
    %359 = vmatpush1.msra.mxu0 0.0
    %360 = vmatprep.mubr.f32.mxu0 0.0
    %361 = vmatmul.mubr.f32.gmra.mrb[0].mxu0 %v111
    %v362 = vpop.f32.mrb[0].mxu0
    %v363 = vadd.f32 0.0, %v362
    %v364 = vpop.f32.mrb[0].mxu0
    %v365 = vadd.f32 0.0, %v364
    %366 = vmatprep.mubr.f32.mxu0 0.0
    %367 = vmatmul.mubr.f32.gmra.mrb[0].mxu0 %v112
    %v368 = vpop.f32.mrb[0].mxu0
    %v369 = vadd.f32 0.0, %v368
    %v370 = vpop.f32.mrb[0].mxu0
    %v371 = vadd.f32 0.0, %v370
    %372 = vmatprep.mubr.f32.mxu0 0.0
    %373 = vmatmul.mubr.f32.gmra.mrb[0].mxu0 %v113
    %v374 = vpop.f32.mrb[0].mxu0
    %v375 = vadd.f32 0.0, %v374
    %v376 = vpop.f32.mrb[0].mxu0
    %v377 = vadd.f32 0.0, %v376
    %378 = vmatprep.mubr.f32.mxu0 0.0
    %379 = vmatmul.mubr.f32.gmra.mrb[0].mxu0 %v114
    %v380 = vpop.f32.mrb[0].mxu0
    %v381 = vadd.f32 0.0, %v380
    %v382 = vpop.f32.mrb[0].mxu0
    %v383 = vadd.f32 0.0, %v382
    %384 = vmatprep.mubr.f32.mxu0 0.0
    %385 = vmatmul.mubr.f32.gmra.mrb[0].mxu0 %v115
    %v386 = vpop.f32.mrb[0].mxu0
    %v387 = vadd.f32 0.0, %v386
    %v388 = vpop.f32.mrb[0].mxu0
    %v389 = vadd.f32 0.0, %v388
    %390 = vmatprep.mubr.f32.mxu0 0.0
    %391 = vmatmul.mubr.f32.gmra.mrb[0].mxu0 %v116
    %v392 = vpop.f32.mrb[0].mxu0
    %v393 = vadd.f32 0.0, %v392
    %v394 = vpop.f32.mrb[0].mxu0
    %v395 = vadd.f32 0.0, %v394
    %396 = vmatprep.mubr.f32.mxu0 0.0
    %397 = vmatmul.mubr.f32.gmra.mrb[0].mxu0 %v117
    %v398 = vpop.f32.mrb[0].mxu0
    %v399 = vadd.f32 0.0, %v398
    %v400 = vpop.f32.mrb[0].mxu0
    %v401 = vadd.f32 0.0, %v400
    %402 = vmatprep.mubr.f32.mxu0 0.0
    %403 = vmatmul.mubr.f32.gmra.mrb[0].mxu0 %v118
    %v404 = vpop.f32.mrb[0].mxu0
    %v405 = vadd.f32 0.0, %v404
    %v406 = vpop.f32.mrb[0].mxu0
    %v407 = vadd.f32 0.0, %v406
    %408 = vdwg.mxu0
    %v409 = vadd.f32 %v79, %v250
    %v410 = vadd.f32 %v80, %v252
    %v411 = vadd.f32 %v81, %v363
    %v412 = vadd.f32 %v82, %v365
    %v413 = vadd.f32 %v83, %v256
    %v414 = vadd.f32 %v84, %v258
    %v415 = vadd.f32 %v85, %v369
    %v416 = vadd.f32 %v86, %v371
    %v417 = vadd.f32 %v87, %v262
    %v418 = vadd.f32 %v88, %v264
    %v419 = vadd.f32 %v89, %v375
    %v420 = vadd.f32 %v90, %v377
    %v421 = vadd.f32 %v91, %v268
    %v422 = vadd.f32 %v92, %v270
    %v423 = vadd.f32 %v93, %v381
    %v424 = vadd.f32 %v94, %v383
    %v425 = vadd.f32 %v95, %v274
    %v426 = vadd.f32 %v96, %v276
    %v427 = vadd.f32 %v97, %v387
    %v428 = vadd.f32 %v98, %v389
    %v429 = vadd.f32 %v99, %v280
    %v430 = vadd.f32 %v100, %v282
    %v431 = vadd.f32 %v101, %v393
    %v432 = vadd.f32 %v102, %v395
    %v433 = vadd.f32 %v103, %v286
    %v434 = vadd.f32 %v104, %v288
    %v435 = vadd.f32 %v105, %v399
    %v436 = vadd.f32 %v106, %v401
    %v437 = vadd.f32 %v107, %v292
    %v438 = vadd.f32 %v108, %v294
    %v439 = vadd.f32 %v109, %v405
    %v440 = vadd.f32 %v110, %v407
    %441 = vst [vmem:[#allocation2] sm:$0xff] %v409
    %442 = vst [vmem:[#allocation2 + $0x8] sm:$0xff] %v410
    %443 = vst [vmem:[#allocation2 + $0x10] sm:$0xff] %v411
    %444 = vst [vmem:[#allocation2 + $0x18] sm:$0xff] %v412
    %445 = vst [vmem:[#allocation2 + $0x20] sm:$0xff] %v413
    %446 = vst [vmem:[#allocation2 + $0x28] sm:$0xff] %v414
    %447 = vst [vmem:[#allocation2 + $0x30] sm:$0xff] %v415
    %448 = vst [vmem:[#allocation2 + $0x38] sm:$0xff] %v416
    %449 = vst [vmem:[#allocation2 + $0x40] sm:$0xff] %v417
    %450 = vst [vmem:[#allocation2 + $0x48] sm:$0xff] %v418
    %451 = vst [vmem:[#allocation2 + $0x50] sm:$0xff] %v419
    %452 = vst [vmem:[#allocation2 + $0x58] sm:$0xff] %v420
    %453 = vst [vmem:[#allocation2 + $0x60] sm:$0xff] %v421
    %454 = vst [vmem:[#allocation2 + $0x68] sm:$0xff] %v422
    %455 = vst [vmem:[#allocation2 + $0x70] sm:$0xff] %v423
    %456 = vst [vmem:[#allocation2 + $0x78] sm:$0xff] %v424
    %457 = vst [vmem:[#allocation2 + $0x80] sm:$0xff] %v425
    %458 = vst [vmem:[#allocation2 + $0x88] sm:$0xff] %v426
    %459 = vst [vmem:[#allocation2 + $0x90] sm:$0xff] %v427
    %460 = vst [vmem:[#allocation2 + $0x98] sm:$0xff] %v428
    %461 = vst [vmem:[#allocation2 + $0xa0] sm:$0xff] %v429
    %462 = vst [vmem:[#allocation2 + $0xa8] sm:$0xff] %v430
    %463 = vst [vmem:[#allocation2 + $0xb0] sm:$0xff] %v431
    %464 = vst [vmem:[#allocation2 + $0xb8] sm:$0xff] %v432
    %465 = vst [vmem:[#allocation2 + $0xc0] sm:$0xff] %v433
    %466 = vst [vmem:[#allocation2 + $0xc8] sm:$0xff] %v434
    %467 = vst [vmem:[#allocation2 + $0xd0] sm:$0xff] %v435
    %468 = vst [vmem:[#allocation2 + $0xd8] sm:$0xff] %v436
    %469 = vst [vmem:[#allocation2 + $0xe0] sm:$0xff] %v437
    %470 = vst [vmem:[#allocation2 + $0xe8] sm:$0xff] %v438
    %471 = vst [vmem:[#allocation2 + $0xf0] sm:$0xff] %v439
    %472 = vst [vmem:[#allocation2 + $0xf8] sm:$0xff] %v440
    // Predicated region
    $region26: #{tpu_custom_call.1} parent=1 // pred_check
      %p473 = pneg %p43
    $region27: #{tpu_custom_call.1} parent=1 // pred_check_branch
      %475 = sbr.rel (%p473) target = $region29
    $region28: #{tpu_custom_call.1} parent=1 // pred_region
      %v476 = vld [vmem:[#allocation2] sm:$0xff]
      %v477 = vld [vmem:[#allocation2 + $0x8] sm:$0xff]
      %v478 = vld [vmem:[#allocation2 + $0x10] sm:$0xff]
      %v479 = vld [vmem:[#allocation2 + $0x18] sm:$0xff]
      %v480 = vld [vmem:[#allocation2 + $0x20] sm:$0xff]
      %v481 = vld [vmem:[#allocation2 + $0x28] sm:$0xff]
      %v482 = vld [vmem:[#allocation2 + $0x30] sm:$0xff]
      %v483 = vld [vmem:[#allocation2 + $0x38] sm:$0xff]
      %v484 = vld [vmem:[#allocation2 + $0x40] sm:$0xff]
      %v485 = vld [vmem:[#allocation2 + $0x48] sm:$0xff]
      %v486 = vld [vmem:[#allocation2 + $0x50] sm:$0xff]
      %v487 = vld [vmem:[#allocation2 + $0x58] sm:$0xff]
      %v488 = vld [vmem:[#allocation2 + $0x60] sm:$0xff]
      %v489 = vld [vmem:[#allocation2 + $0x68] sm:$0xff]
      %v490 = vld [vmem:[#allocation2 + $0x70] sm:$0xff]
      %v491 = vld [vmem:[#allocation2 + $0x78] sm:$0xff]
      %v492 = vld [vmem:[#allocation2 + $0x80] sm:$0xff]
      %v493 = vld [vmem:[#allocation2 + $0x88] sm:$0xff]
      %v494 = vld [vmem:[#allocation2 + $0x90] sm:$0xff]
      %v495 = vld [vmem:[#allocation2 + $0x98] sm:$0xff]
      %v496 = vld [vmem:[#allocation2 + $0xa0] sm:$0xff]
      %v497 = vld [vmem:[#allocation2 + $0xa8] sm:$0xff]
      %v498 = vld [vmem:[#allocation2 + $0xb0] sm:$0xff]
      %v499 = vld [vmem:[#allocation2 + $0xb8] sm:$0xff]
      %v500 = vld [vmem:[#allocation2 + $0xc0] sm:$0xff]
      %v501 = vld [vmem:[#allocation2 + $0xc8] sm:$0xff]
      %v502 = vld [vmem:[#allocation2 + $0xd0] sm:$0xff]
      %v503 = vld [vmem:[#allocation2 + $0xd8] sm:$0xff]
      %v504 = vld [vmem:[#allocation2 + $0xe0] sm:$0xff]
      %v505 = vld [vmem:[#allocation2 + $0xe8] sm:$0xff]
      %v506 = vld [vmem:[#allocation2 + $0xf0] sm:$0xff]
      %v507 = vld [vmem:[#allocation2 + $0xf8] sm:$0xff]
      %v508 = vld [vmem:[%s2] sm:$0xf]
      %v510 = vlaneseq
      %v511 = vshrl.u32 %v510, 7
      %v512 = vsub.s32 0, %v511
      %v513 = vrot.slane %v508, %v512
      %v514 = vlaneseq
      %v515 = vshrl.u32 %v514, 7
      %v516 = vsub.s32 1, %v515
      %v517 = vrot.slane %v508, %v516
      %v518 = vlaneseq
      %v519 = vshrl.u32 %v518, 7
      %v520 = vsub.s32 2, %v519
      %v521 = vrot.slane %v508, %v520
      %v522 = vlaneseq
      %v523 = vshrl.u32 %v522, 7
      %v524 = vsub.s32 3, %v523
      %v525 = vrot.slane %v508, %v524
      %v530 = vadd.f32 %v476, %v513
      %v531 = vadd.f32 %v477, %v517
      %v532 = vadd.f32 %v478, %v521
      %v533 = vadd.f32 %v479, %v525
      %v534 = vadd.f32 %v480, %v513
      %v535 = vadd.f32 %v481, %v517
      %v536 = vadd.f32 %v482, %v521
      %v537 = vadd.f32 %v483, %v525
      %v538 = vadd.f32 %v484, %v513
      %v539 = vadd.f32 %v485, %v517
      %v540 = vadd.f32 %v486, %v521
      %v541 = vadd.f32 %v487, %v525
      %v542 = vadd.f32 %v488, %v513
      %v543 = vadd.f32 %v489, %v517
      %v544 = vadd.f32 %v490, %v521
      %v545 = vadd.f32 %v491, %v525
      %v546 = vadd.f32 %v492, %v513
      %v547 = vadd.f32 %v493, %v517
      %v548 = vadd.f32 %v494, %v521
      %v549 = vadd.f32 %v495, %v525
      %v550 = vadd.f32 %v496, %v513
      %v551 = vadd.f32 %v497, %v517
      %v552 = vadd.f32 %v498, %v521
      %v553 = vadd.f32 %v499, %v525
      %v554 = vadd.f32 %v500, %v513
      %v555 = vadd.f32 %v501, %v517
      %v556 = vadd.f32 %v502, %v521
      %v557 = vadd.f32 %v503, %v525
      %v558 = vadd.f32 %v504, %v513
      %v559 = vadd.f32 %v505, %v517
      %v560 = vadd.f32 %v506, %v521
      %v561 = vadd.f32 %v507, %v525
      %562 = vst [vmem:[#allocation8] sm:$0xff] %v530
      %563 = vst [vmem:[#allocation8 + $0x8] sm:$0xff] %v531
      %564 = vst [vmem:[#allocation8 + $0x10] sm:$0xff] %v532
      %565 = vst [vmem:[#allocation8 + $0x18] sm:$0xff] %v533
      %566 = vst [vmem:[#allocation8 + $0x20] sm:$0xff] %v534
      %567 = vst [vmem:[#allocation8 + $0x28] sm:$0xff] %v535
      %568 = vst [vmem:[#allocation8 + $0x30] sm:$0xff] %v536
      %569 = vst [vmem:[#allocation8 + $0x38] sm:$0xff] %v537
      %570 = vst [vmem:[#allocation8 + $0x40] sm:$0xff] %v538
      %571 = vst [vmem:[#allocation8 + $0x48] sm:$0xff] %v539
      %572 = vst [vmem:[#allocation8 + $0x50] sm:$0xff] %v540
      %573 = vst [vmem:[#allocation8 + $0x58] sm:$0xff] %v541
      %574 = vst [vmem:[#allocation8 + $0x60] sm:$0xff] %v542
      %575 = vst [vmem:[#allocation8 + $0x68] sm:$0xff] %v543
      %576 = vst [vmem:[#allocation8 + $0x70] sm:$0xff] %v544
      %577 = vst [vmem:[#allocation8 + $0x78] sm:$0xff] %v545
      %578 = vst [vmem:[#allocation8 + $0x80] sm:$0xff] %v546
      %579 = vst [vmem:[#allocation8 + $0x88] sm:$0xff] %v547
      %580 = vst [vmem:[#allocation8 + $0x90] sm:$0xff] %v548
      %581 = vst [vmem:[#allocation8 + $0x98] sm:$0xff] %v549
      %582 = vst [vmem:[#allocation8 + $0xa0] sm:$0xff] %v550
      %583 = vst [vmem:[#allocation8 + $0xa8] sm:$0xff] %v551
      %584 = vst [vmem:[#allocation8 + $0xb0] sm:$0xff] %v552
      %585 = vst [vmem:[#allocation8 + $0xb8] sm:$0xff] %v553
      %586 = vst [vmem:[#allocation8 + $0xc0] sm:$0xff] %v554
      %587 = vst [vmem:[#allocation8 + $0xc8] sm:$0xff] %v555
      %588 = vst [vmem:[#allocation8 + $0xd0] sm:$0xff] %v556
      %589 = vst [vmem:[#allocation8 + $0xd8] sm:$0xff] %v557
      %590 = vst [vmem:[#allocation8 + $0xe0] sm:$0xff] %v558
      %591 = vst [vmem:[#allocation8 + $0xe8] sm:$0xff] %v559
      %592 = vst [vmem:[#allocation8 + $0xf0] sm:$0xff] %v560
      %593 = vst [vmem:[#allocation8 + $0xf8] sm:$0xff] %v561
    $region29: #{tpu_custom_call.1} parent=1 // pred_fallthru
      _
    // Predicated region
    $region30: #{tpu_custom_call.1} parent=1 // pred_check
      _
    $region31: #{tpu_custom_call.1} parent=1 // pred_check_branch
      %595 = sbr.rel (0) target = $region33
    $region32: #{tpu_custom_call.1} parent=1 // pred_region
      %s597 = ssub.s32 4096, 4096
      %598 = vsyncadd [#allocation5], %s597
      %s599 = sshll.u32 [#allocation8], 4
      %s600 = int_to_ptr.vmem [resolvable:$true] %s599
      %605 = dma.vmem_to_hbm [thread:$0]  %s600, 4096, %s3, [#allocation5], 512, 512, 32
    $region33: #{tpu_custom_call.1} parent=1 // pred_fallthru
      _
    // Predicated region
    $region34: #{tpu_custom_call.1} parent=1 // pred_check
      _
    $region35: #{tpu_custom_call.1} parent=1 // pred_check_branch
      %607 = sbr.rel (0) target = $region37
    $region36: #{tpu_custom_call.1} parent=1 // pred_region
      %608 = dma.done [#allocation5], 4096
    $region37: #{tpu_custom_call.1} parent=1 // pred_fallthru
      _
    %609 = vsyncpa [#allocation4], 1
    %610 = vsyncpa [#allocation7], 1
    %611 = vsyncpa [#allocation5], 1

</llo_original>
